<compile_context>
chip_gen: v7x
topology: tpu7x:2x2x1
jax: 0.10.0
libtpu: 0.0.40
codegen_flags: <defaults>
</compile_context>

<pallas_src>
import functools
import math

import jax
import jax.numpy as jnp
from jax.experimental import pallas as pl
from jax.experimental.pallas import tpu as pltpu


def _round_up(x, m):
    return (x + m - 1) // m * m


def _vmem_capacity_bytes():
    """Physical VMEM per TensorCore; conservative 64 MiB (v7x) fallback."""
    try:
        info = pltpu.get_tpu_info()
        cap = getattr(info, "vmem_capacity_bytes", None)
        if cap:
            return int(cap)
    except Exception:
        pass
    return 64 * 1024 * 1024


def prepare_svd_weights(A, B, bias=None, dtype=None):
    """One-time weight prep: fold transpose + rank zero-padding into storage.

    A: (out_features, rank)  -> aT: (rank_pad, out_features)
    B: (rank, in_features)   -> bT: (in_features, rank_pad)
    bias: (out_features,) | None -> (1, out_features) | None
    rank_pad = max(128, round_up(rank, 128)) so the low-rank intermediate is
    lane-dense.  Hoist this out of the per-call path in production (store the
    weights pre-transposed / pre-padded).
    """
    out_features, rank = A.shape
    rank_b, in_features = B.shape
    assert rank_b == rank, "A and B rank mismatch"
    if dtype is None:
        dtype = A.dtype
    rank_pad = max(128, _round_up(rank, 128))

    bT = jnp.swapaxes(jnp.asarray(B), 0, 1).astype(dtype)   # (in, rank)
    aT = jnp.swapaxes(jnp.asarray(A), 0, 1).astype(dtype)   # (rank, out)
    if rank_pad != rank:
        bT = jnp.pad(bT, ((0, 0), (0, rank_pad - rank)))
        aT = jnp.pad(aT, ((0, rank_pad - rank), (0, 0)))
    bias2d = None
    if bias is not None:
        bias2d = jnp.asarray(bias, dtype=dtype).reshape(1, out_features)
    return bT, aT, bias2d


def _svd_linear_kernel(*refs, has_bias, carry_low_rank):
    # Ref order: x, bT, aT, [bias], out, ylow_scratch
    if has_bias:
        x_ref, bT_ref, aT_ref, bias_ref, o_ref, ylow_ref = refs
    else:
        x_ref, bT_ref, aT_ref, o_ref, ylow_ref = refs
        bias_ref = None

    if carry_low_rank:
        # First projection (x @ B^T) only when the N-tile index wraps, i.e.
        # once per row tile; carried in VMEM scratch across the j axis.
        @pl.when(pl.program_id(1) == 0)
        def _():
            ylow_ref[...] = jnp.dot(
                x_ref[...], bT_ref[...], preferred_element_type=jnp.float32
            ).astype(ylow_ref.dtype)

        ylow = ylow_ref[...]
    else:
        # Single N tile: no scratch round-trip needed.
        ylow = jnp.dot(
            x_ref[...], bT_ref[...], preferred_element_type=jnp.float32
        ).astype(x_ref.dtype)

    # Second projection: ylow @ A^T (+ bias), f32 accumulate.
    y = jnp.dot(ylow, aT_ref[...], preferred_element_type=jnp.float32)
    if has_bias:
        y = y + bias_ref[...].astype(jnp.float32)
    o_ref[...] = y.astype(o_ref.dtype)


@functools.partial(
    jax.jit, static_argnames=("block_m", "block_n", "allow_pipeline_mode"))
def _svd_linear_impl(x, bT, aT, bias2d, *, block_m, block_n,
                     allow_pipeline_mode):
    in_features, rank_pad = bT.shape
    rank_pad_a, out_features = aT.shape
    assert rank_pad_a == rank_pad
    assert x.shape[-1] == in_features
    has_bias = bias2d is not None

    lead = x.shape[:-1]
    m = math.prod(lead)
    x2d = x.reshape(m, in_features)

    xsz = jnp.dtype(x.dtype).itemsize
    wsz = jnp.dtype(bT.dtype).itemsize
    osz = xsz

    # ---- N (out_features) tiling: lane-dense, bounded tiles. ----
    block_n = max(128, (block_n // 128) * 128)
    tn = out_features if out_features <= block_n else block_n
    grid_n = pl.cdiv(out_features, tn)

    # ---- Per-generation VMEM budget (v5e/v6e: 128 MiB, v7x: 64 MiB). ----
    vmem_cap = _vmem_capacity_bytes()
    budget = int(vmem_cap * 0.70)        # tile-sizing budget (headroom below limit)
    vmem_limit = int(vmem_cap * 0.80)    # compiler scoped-VMEM limit

    # ---- M (row) tiling sized from the budget. ----
    block_m = max(8, (block_m // 8) * 8)
    bsz = jnp.dtype(bias2d.dtype).itemsize if has_bias else 0
    # tm-independent footprint: resident B^T, A^T tile, bias tile (x2 buffers).
    fixed = 2 * in_features * rank_pad * wsz + 2 * rank_pad * tn * wsz
    if has_bias:
        fixed += 2 * tn * bsz
    # Per-row-of-tm footprint: x tile (up to 3 buffers), out tile (2), scratch.
    per_row = 3 * in_features * xsz + 2 * tn * osz + rank_pad * xsz
    tm_budget = max(8, ((budget - fixed) // max(per_row, 1)) // 8 * 8)
    # Soft cap: keep one x buffer <= 8 MiB so row-boundary DMAs pipeline well.
    tm_xcap = max(8, ((8 << 20) // max(in_features * xsz, 1)) // 8 * 8)
    tm_candidate = max(8, min(block_m, tm_budget, tm_xcap))
    tm = m if m <= tm_candidate else tm_candidate
    grid_m = pl.cdiv(m, tm)

    # Carry the (tm, rank_pad) low-rank intermediate across the N tiles.
    carry_low_rank = grid_n > 1
    # TODO(synk): on v7x with grid_m == 1, drop the carry and mark the N axis
    # "parallel" so the second TensorCore shares the work (needs core count).

    # Optional pipeline_mode tweaks, only where they matter; the caller has a
    # fallback path for runtimes that reject BlockSpec.pipeline_mode.
    use_pm = bool(allow_pipeline_mode) and hasattr(pl, "Buffered")

    def _spec(shape, index_map, bufs=None):
        if use_pm and bufs is not None:
            return pl.BlockSpec(shape, index_map,
                                pipeline_mode=pl.Buffered(bufs))
        return pl.BlockSpec(shape, index_map)

    bT_bytes = in_features * rank_pad * wsz
    # B^T never changes block index -> a second buffer is pure VMEM waste.
    bT_bufs = 1 if bT_bytes >= (1 << 20) else None
    # x only changes at row boundaries; 3-deep buffering hides the row DMA
    # behind more than one j step.
    x_bufs = 3 if (grid_n >= 2 and grid_m >= 2) else None

    in_specs = [
        _spec((tm, in_features), lambda i, j: (i, 0), bufs=x_bufs),       # x
        _spec((in_features, rank_pad), lambda i, j: (0, 0), bufs=bT_bufs),  # B^T
        _spec((rank_pad, tn), lambda i, j: (0, j)),                        # A^T
    ]
    inputs = [x2d, bT, aT]
    if has_bias:
        in_specs.append(_spec((1, tn), lambda i, j: (0, j)))
        inputs.append(bias2d)

    kernel = functools.partial(_svd_linear_kernel,
                               has_bias=has_bias,
                               carry_low_rank=carry_low_rank)

    flops = int(2 * m * rank_pad * (in_features + out_features))
    bytes_accessed = int(
        m * in_features * xsz + m * out_features * osz
        + bT_bytes + grid_m * rank_pad * out_features * wsz
        + (out_features * bsz if has_bias else 0))

    out2d = pl.pallas_call(
        kernel,
        out_shape=jax.ShapeDtypeStruct((m, out_features), x.dtype),
        grid_spec=pltpu.PrefetchScalarGridSpec(
            num_scalar_prefetch=0,
            grid=(grid_m, grid_n),
            in_specs=in_specs,
            out_specs=pl.BlockSpec((tm, tn), lambda i, j: (i, j)),
            scratch_shapes=[pltpu.VMEM((tm, rank_pad), x.dtype)],
        ),
        compiler_params=pltpu.CompilerParams(
            dimension_semantics=(("parallel", "arbitrary") if carry_low_rank
                                 else ("parallel", "parallel")),
            vmem_limit_bytes=vmem_limit,
        ),
        cost_estimate=pl.CostEstimate(
            flops=flops, transcendentals=0, bytes_accessed=bytes_accessed),
    )(*inputs)

    return out2d.reshape(*lead, out_features)


def svd_linear_prepared(x, bT, aT, bias2d=None, *, block_m=512, block_n=2048):
    """Forward with pre-prepared weights (see prepare_svd_weights)."""
    try:
        return _svd_linear_impl(x, bT, aT, bias2d, block_m=block_m,
                                block_n=block_n, allow_pipeline_mode=True)
    except Exception:
        # Runtime rejected BlockSpec.pipeline_mode (or similar); retry plain.
        return _svd_linear_impl(x, bT, aT, bias2d, block_m=block_m,
                                block_n=block_n, allow_pipeline_mode=False)


def svd_linear_iter_forward(x, A, B, bias=None, *, block_m=512, block_n=2048):
    """Pallas SVDLinearIter.forward: y = (x @ B^T) @ A^T (+ bias).

    NOTE: in production, call prepare_svd_weights once and use
    svd_linear_prepared directly; prep is done per call here for convenience.
    """
    bT, aT, bias2d = prepare_svd_weights(A, B, bias=bias, dtype=x.dtype)
    return svd_linear_prepared(x, bT, aT, bias2d,
                               block_m=block_m, block_n=block_n)


if __name__ == "__main__":
    key = jax.random.PRNGKey(0)
    HI = jax.lax.Precision.HIGHEST

    # --- Test 1: module-like API, small shapes, with bias (single-tile path).
    batch, seq = 2, 8
    in_features, out_features, rank = 32, 32, 8
    k1, k2, k3, k4, key = jax.random.split(key, 5)
    x = jax.random.normal(k1, (batch, seq, in_features), dtype=jnp.float32)
    A = jax.random.normal(k2, (out_features, rank), dtype=jnp.float32) * 0.1
    B = jax.random.normal(k3, (rank, in_features), dtype=jnp.float32) * 0.1
    bias = jax.random.normal(k4, (out_features,), dtype=jnp.float32) * 0.01

    y = jax.block_until_ready(svd_linear_iter_forward(x, A, B, bias))
    y_ref = jnp.einsum("...i,ri->...r", x, B, precision=HI)
    y_ref = jnp.einsum("...r,or->...o", y_ref, A, precision=HI) + bias
    assert y.shape == (batch, seq, out_features)
    err = float(jnp.max(jnp.abs(y - y_ref)) / (jnp.max(jnp.abs(y_ref)) + 1e-6))
    assert err < 2e-2, f"test1 mismatch: rel err {err}"

    # --- Test 2: prepared-weight API, no bias, tiled grid with edge overhang
    #     (exercises the carried low-rank scratch and masked partial tiles).
    batch2, seq2 = 3, 7
    in2, out2, rank2 = 256, 384, 24
    k1, k2, k3, key = jax.random.split(key, 4)
    x2 = jax.random.normal(k1, (batch2, seq2, in2), dtype=jnp.float32)
    A2 = jax.random.normal(k2, (out2, rank2), dtype=jnp.float32) * 0.05
    B2 = jax.random.normal(k3, (rank2, in2), dtype=jnp.float32) * 0.05

    bT2, aT2, _ = prepare_svd_weights(A2, B2, bias=None, dtype=x2.dtype)
    y2 = jax.block_until_ready(
        svd_linear_prepared(x2, bT2, aT2, None, block_m=8, block_n=128))
    y2_ref = jnp.einsum("...i,ri->...r", x2, B2, precision=HI)
    y2_ref = jnp.einsum("...r,or->...o", y2_ref, A2, precision=HI)
    assert y2.shape == (batch2, seq2, out2)
    err2 = float(jnp.max(jnp.abs(y2 - y2_ref)) /
                 (jnp.max(jnp.abs(y2_ref)) + 1e-6))
    assert err2 < 2e-2, f"test2 mismatch: rel err {err2}"

    print("KERNEL_OK")
</pallas_src>

<mosaic_0001>
module attributes {stable_mosaic.version = 11 : i64} {
  func.func @_svd_linear_kernel(%arg0: i32, %arg1: i32, %arg2: memref<16x32xf32, #tpu.memory_space<vmem>>, %arg3: memref<32x128xf32, #tpu.memory_space<vmem>>, %arg4: memref<128x32xf32, #tpu.memory_space<vmem>>, %arg5: memref<1x32xf32, #tpu.memory_space<vmem>>, %arg6: memref<16x32xf32, #tpu.memory_space<vmem>>, %arg7: memref<16x128xf32, #tpu.memory_space<vmem>>) attributes {dimension_semantics = [#tpu.dimension_semantics<parallel>, #tpu.dimension_semantics<parallel>], iteration_bounds = array<i64: 1, 1>, scalar_prefetch = 0 : i64, scratch_operands = 1 : i64, tpu.core_type = #tpu.core_type<tc>, window_params = [{transform_indices = @transform_0, window_bounds = array<i64: 16, 32>}, {pipeline_mode = #tpu.pipeline_mode<synchronous>, transform_indices = @transform_1, window_bounds = array<i64: 32, 128>}, {transform_indices = @transform_2, window_bounds = array<i64: 128, 32>}, {transform_indices = @transform_3, window_bounds = array<i64: 1, 32>}, {transform_indices = @transform_4, window_bounds = array<i64: 16, 32>}]} {
    %c0 = arith.constant 0 : index
    %c0_0 = arith.constant 0 : index
    %0 = vector.load %arg2[%c0, %c0_0] : memref<16x32xf32, #tpu.memory_space<vmem>>, vector<16x32xf32>
    %c0_1 = arith.constant 0 : index
    %c0_2 = arith.constant 0 : index
    %1 = vector.load %arg3[%c0_1, %c0_2] : memref<32x128xf32, #tpu.memory_space<vmem>>, vector<32x128xf32>
    %cst = arith.constant dense<0.000000e+00> : vector<16x128xf32>
    %2 = tpu.matmul %0, %1, %cst {dimension_numbers = #tpu.dot_dimension_numbers<[1], [0], [0], [1], [0, 0, 1, 1], [], []>} : vector<16x32xf32>, vector<32x128xf32>, vector<16x128xf32> -> vector<16x128xf32>
    %c0_3 = arith.constant 0 : index
    %c0_4 = arith.constant 0 : index
    %3 = vector.load %arg4[%c0_3, %c0_4] : memref<128x32xf32, #tpu.memory_space<vmem>>, vector<128x32xf32>
    %cst_5 = arith.constant dense<0.000000e+00> : vector<16x32xf32>
    %4 = tpu.matmul %2, %3, %cst_5 {dimension_numbers = #tpu.dot_dimension_numbers<[1], [0], [0], [1], [0, 0, 1, 1], [], []>} : vector<16x128xf32>, vector<128x32xf32>, vector<16x32xf32> -> vector<16x32xf32>
    %c0_6 = arith.constant 0 : index
    %c0_7 = arith.constant 0 : index
    %5 = vector.load %arg5[%c0_6, %c0_7] : memref<1x32xf32, #tpu.memory_space<vmem>>, vector<1x32xf32>
    %6 = vector.broadcast %5 : vector<1x32xf32> to vector<16x32xf32>
    %7 = arith.addf %4, %6 : vector<16x32xf32>
    %c0_8 = arith.constant 0 : index
    %c0_9 = arith.constant 0 : index
    %8 = vector.load %arg6[%c0_8, %c0_9] : memref<16x32xf32, #tpu.memory_space<vmem>>, vector<16x32xf32>
    tpu.vector_store %arg6[%c0_8, %c0_9], %7 {strides = array<i32>} : memref<16x32xf32, #tpu.memory_space<vmem>>, vector<16x32xf32>,
    return
  }
  func.func @transform_0(%arg0: i32, %arg1: i32) -> (i32, i32) {
    %c0_i32 = arith.constant 0 : i32
    %c0_i32_0 = arith.constant 0 : i32
    return %arg0, %c0_i32 : i32, i32
  }
  func.func @transform_1(%arg0: i32, %arg1: i32) -> (i32, i32) {
    %c0_i32 = arith.constant 0 : i32
    %c0_i32_0 = arith.constant 0 : i32
    %c0_i32_1 = arith.constant 0 : i32
    return %c0_i32, %c0_i32_0 : i32, i32
  }
  func.func @transform_2(%arg0: i32, %arg1: i32) -> (i32, i32) {
    %c0_i32 = arith.constant 0 : i32
    %c0_i32_0 = arith.constant 0 : i32
    return %c0_i32, %arg1 : i32, i32
  }
  func.func @transform_3(%arg0: i32, %arg1: i32) -> (i32, i32) {
    %c0_i32 = arith.constant 0 : i32
    %c0_i32_0 = arith.constant 0 : i32
    return %c0_i32, %arg1 : i32, i32
  }
  func.func @transform_4(%arg0: i32, %arg1: i32) -> (i32, i32) {
    %c0_i32 = arith.constant 0 : i32
    return %arg0, %arg1 : i32, i32
  }
}

module attributes {stable_mosaic.version = 11 : i64} {
  func.func @_svd_linear_kernel(%arg0: i32, %arg1: i32, %arg2: memref<16x32xf32, #tpu.memory_space<vmem>>, %arg3: memref<32x128xf32, #tpu.memory_space<vmem>>, %arg4: memref<128x32xf32, #tpu.memory_space<vmem>>, %arg5: memref<1x32xf32, #tpu.memory_space<vmem>>, %arg6: memref<16x32xf32, #tpu.memory_space<vmem>>, %arg7: memref<16x128xf32, #tpu.memory_space<vmem>>) attributes {dimension_semantics = [#tpu.dimension_semantics<parallel>, #tpu.dimension_semantics<parallel>], iteration_bounds = array<i64: 1, 1>, scalar_prefetch = 0 : i64, scratch_operands = 1 : i64, tpu.core_type = #tpu.core_type<tc>, window_params = [{transform_indices = @transform_0, window_bounds = array<i64: 16, 32>}, {pipeline_mode = #tpu.pipeline_mode<synchronous>, transform_indices = @transform_1, window_bounds = array<i64: 32, 128>}, {transform_indices = @transform_2, window_bounds = array<i64: 128, 32>}, {transform_indices = @transform_3, window_bounds = array<i64: 1, 32>}, {transform_indices = @transform_4, window_bounds = array<i64: 16, 32>}]} {
    %c0 = arith.constant 0 : index
    %c0_0 = arith.constant 0 : index
    %0 = vector.load %arg2[%c0, %c0_0] : memref<16x32xf32, #tpu.memory_space<vmem>>, vector<16x32xf32>
    %c0_1 = arith.constant 0 : index
    %c0_2 = arith.constant 0 : index
    %1 = vector.load %arg3[%c0_1, %c0_2] : memref<32x128xf32, #tpu.memory_space<vmem>>, vector<32x128xf32>
    %cst = arith.constant dense<0.000000e+00> : vector<16x128xf32>
    %2 = tpu.matmul %0, %1, %cst {dimension_numbers = #tpu.dot_dimension_numbers<[1], [0], [0], [1], [0, 0, 1, 1], [], []>} : vector<16x32xf32>, vector<32x128xf32>, vector<16x128xf32> -> vector<16x128xf32>
    %c0_3 = arith.constant 0 : index
    %c0_4 = arith.constant 0 : index
    %3 = vector.load %arg4[%c0_3, %c0_4] : memref<128x32xf32, #tpu.memory_space<vmem>>, vector<128x32xf32>
    %cst_5 = arith.constant dense<0.000000e+00> : vector<16x32xf32>
    %4 = tpu.matmul %2, %3, %cst_5 {dimension_numbers = #tpu.dot_dimension_numbers<[1], [0], [0], [1], [0, 0, 1, 1], [], []>} : vector<16x128xf32>, vector<128x32xf32>, vector<16x32xf32> -> vector<16x32xf32>
    %c0_6 = arith.constant 0 : index
    %c0_7 = arith.constant 0 : index
    %5 = vector.load %arg5[%c0_6, %c0_7] : memref<1x32xf32, #tpu.memory_space<vmem>>, vector<1x32xf32>
    %6 = vector.broadcast %5 : vector<1x32xf32> to vector<16x32xf32>
    %7 = arith.addf %4, %6 : vector<16x32xf32>
    %c0_8 = arith.constant 0 : index
    %c0_9 = arith.constant 0 : index
    %8 = vector.load %arg6[%c0_8, %c0_9] : memref<16x32xf32, #tpu.memory_space<vmem>>, vector<16x32xf32>
    tpu.vector_store %arg6[%c0_8, %c0_9], %7 {strides = array<i32>} : memref<16x32xf32, #tpu.memory_space<vmem>>, vector<16x32xf32>,
    return
  }
  func.func @transform_0(%arg0: i32, %arg1: i32) -> (i32, i32) {
    %c0_i32 = arith.constant 0 : i32
    %c0_i32_0 = arith.constant 0 : i32
    return %arg0, %c0_i32 : i32, i32
  }
  func.func @transform_1(%arg0: i32, %arg1: i32) -> (i32, i32) {
    %c0_i32 = arith.constant 0 : i32
    %c0_i32_0 = arith.constant 0 : i32
    %c0_i32_1 = arith.constant 0 : i32
    return %c0_i32, %c0_i32_0 : i32, i32
  }
  func.func @transform_2(%arg0: i32, %arg1: i32) -> (i32, i32) {
    %c0_i32 = arith.constant 0 : i32
    %c0_i32_0 = arith.constant 0 : i32
    return %c0_i32, %arg1 : i32, i32
  }
  func.func @transform_3(%arg0: i32, %arg1: i32) -> (i32, i32) {
    %c0_i32 = arith.constant 0 : i32
    %c0_i32_0 = arith.constant 0 : i32
    return %c0_i32, %arg1 : i32, i32
  }
  func.func @transform_4(%arg0: i32, %arg1: i32) -> (i32, i32) {
    %c0_i32 = arith.constant 0 : i32
    return %arg0, %arg1 : i32, i32
  }
}

</mosaic_0001>

<llo_original>
// kernel: _svd_linear_impl.1
$region0: #{_svd_linear_impl.1}
  #allocation0 [shape = 'u32[]', space=smem, size = 0x4, offset = 0x4, fixed_abs, tag = 'smem constant byte address 0x4 - core index']
  #allocation1 [shape = 'u32[144,128]{1,0:T(1,128)}', space=vmem, size = 0x12000, scoped, tag = 'internal scratch']
  #allocation2 [shape = 'f32[16,128]{1,0:T(8,128)}', space=vmem, size = 0x2000, scoped, tag = 'scratch operand']
  %s0 = inlined_call_operand.vmem [shape: f32[16,32], index: 0, kind: input, shape index: {}]
  %s1 = inlined_call_operand.vmem [shape: f32[32,128], index: 1, kind: input, shape index: {}]
  %s2 = inlined_call_operand.vmem [shape: f32[128,32], index: 2, kind: input, shape index: {}]
  %s3 = inlined_call_operand.vmem [shape: f32[1,32], index: 3, kind: input, shape index: {}]
  %s4 = inlined_call_operand.hbm [shape: f32[16,32], index: 4, kind: output, shape index: {}]
  %s5 = sld [smem:[#allocation0]]
  $region26: #{_svd_linear_impl.1} parent=0
    _
  %s7 = ssub.s32 1, %s5
  %s8 = scalar_select 0, %s7, %s5
  $region1: #{_svd_linear_impl.1} parent=0
    #allocation3 [shape = 'u8[8192]{0}', space=vmem, size = 0x2000, scoped, tag = 'output window, operand 0, single buffered']
    #allocation4 [shape = 's32[1]{0}', space=sflag, size = 0x4, scoped, tag = 'scoped memory for _svd_linear_impl.1']
    %9 = vsyncpa [#allocation4], 0
    // Predicated region
    $region2: #{_svd_linear_impl.1} parent=1 // pred_check
      _
    $region3: #{_svd_linear_impl.1} parent=1 // pred_check_branch
      %11 = sbr.rel (0) target = $region5
    $region4: #{_svd_linear_impl.1} parent=1 // pred_region
      _
    $region5: #{_svd_linear_impl.1} parent=1 // pred_fallthru
      _
    // Predicated region
    $region6: #{_svd_linear_impl.1} parent=1 // pred_check
      _
    $region7: #{_svd_linear_impl.1} parent=1 // pred_check_branch
      %13 = sbr.rel (0) target = $region9
    $region8: #{_svd_linear_impl.1} parent=1 // pred_region
      _
    $region9: #{_svd_linear_impl.1} parent=1 // pred_fallthru
      _
    // Predicated region
    $region10: #{_svd_linear_impl.1} parent=1 // pred_check
      _
    $region11: #{_svd_linear_impl.1} parent=1 // pred_check_branch
      %15 = sbr.rel (0) target = $region13
    $region12: #{_svd_linear_impl.1} parent=1 // pred_region
      _
    $region13: #{_svd_linear_impl.1} parent=1 // pred_fallthru
      _
    // Predicated region
    $region14: #{_svd_linear_impl.1} parent=1 // pred_check
      _
    $region15: #{_svd_linear_impl.1} parent=1 // pred_check_branch
      %17 = sbr.rel (0) target = $region17
    $region16: #{_svd_linear_impl.1} parent=1 // pred_region
      _
    $region17: #{_svd_linear_impl.1} parent=1 // pred_fallthru
      _
    %v18 = vld [vmem:[%s0] sm:$0xff]
    %v19 = vld [vmem:[%s0 + $0x8] sm:$0xff]
    %v20 = vld [vmem:[%s1] sm:$0xff]
    %v21 = vld [vmem:[%s1 + $0x8] sm:$0xff]
    %v22 = vld [vmem:[%s1 + $0x10] sm:$0xff]
    %v23 = vld [vmem:[%s1 + $0x18] sm:$0xff]
    %vm24 = vcmask 261120
    %v26 = vsel %vm24, %v18, 0
    %v29 = vsel %vm24, %v19, 0
    %31 = vmatprep.subr.mxu0 0.0
    %32 = vmatpush1.msra.mxu0 %v20
    %33 = vmatprep.subr.mxu0 0.0
    %34 = vmatpush1.msra.mxu0 %v21
    %35 = vmatprep.subr.mxu0 0.0
    %36 = vmatpush1.msra.mxu0 %v22
    %37 = vmatprep.subr.mxu0 0.0
    %38 = vmatpush1.msra.mxu0 %v23
    %39 = vmatprep.subr.mxu0 0.0
    %40 = vmatpush1.msra.mxu0 0.0
    %41 = vmatprep.subr.mxu0 0.0
    %42 = vmatpush1.msra.mxu0 0.0
    %43 = vmatprep.subr.mxu0 0.0
    %44 = vmatpush1.msra.mxu0 0.0
    %45 = vmatprep.subr.mxu0 0.0
    %46 = vmatpush1.msra.mxu0 0.0
    %47 = vmatprep.subr.mxu0 0.0
    %48 = vmatpush1.msra.mxu0 0.0
    %49 = vmatprep.subr.mxu0 0.0
    %50 = vmatpush1.msra.mxu0 0.0
    %51 = vmatprep.subr.mxu0 0.0
    %52 = vmatpush1.msra.mxu0 0.0
    %53 = vmatprep.subr.mxu0 0.0
    %54 = vmatpush1.msra.mxu0 0.0
    %55 = vmatprep.subr.mxu0 0.0
    %56 = vmatpush1.msra.mxu0 0.0
    %57 = vmatprep.subr.mxu0 0.0
    %58 = vmatpush1.msra.mxu0 0.0
    %59 = vmatprep.subr.mxu0 0.0
    %60 = vmatpush1.msra.mxu0 0.0
    %61 = vmatprep.subr.mxu0 0.0
    %62 = vmatpush1.msra.mxu0 0.0
    %63 = vmatprep.subr.mxu0 0.0
    %64 = vmatpush1.msra.mxu0 0.0
    %65 = vmatprep.subr.mxu0 0.0
    %66 = vmatpush1.msra.mxu0 0.0
    %67 = vmatprep.subr.mxu0 0.0
    %68 = vmatpush1.msra.mxu0 0.0
    %69 = vmatprep.subr.mxu0 0.0
    %70 = vmatpush1.msra.mxu0 0.0
    %71 = vmatprep.subr.mxu0 0.0
    %72 = vmatpush1.msra.mxu0 0.0
    %73 = vmatprep.subr.mxu0 0.0
    %74 = vmatpush1.msra.mxu0 0.0
    %75 = vmatprep.subr.mxu0 0.0
    %76 = vmatpush1.msra.mxu0 0.0
    %77 = vmatprep.subr.mxu0 0.0
    %78 = vmatpush1.msra.mxu0 0.0
    %79 = vmatprep.subr.mxu0 0.0
    %80 = vmatpush1.msra.mxu0 0.0
    %81 = vmatprep.subr.mxu0 0.0
    %82 = vmatpush1.msra.mxu0 0.0
    %83 = vmatprep.subr.mxu0 0.0
    %84 = vmatpush1.msra.mxu0 0.0
    %85 = vmatprep.subr.mxu0 0.0
    %86 = vmatpush1.msra.mxu0 0.0
    %87 = vmatprep.subr.mxu0 0.0
    %88 = vmatpush1.msra.mxu0 0.0
    %89 = vmatprep.subr.mxu0 0.0
    %90 = vmatpush1.msra.mxu0 0.0
    %91 = vmatprep.subr.mxu0 0.0
    %92 = vmatpush1.msra.mxu0 0.0
    %93 = vmatprep.subr.mxu0 0.0
    %94 = vmatpush1.msra.mxu0 0.0
    %95 = vmatprep.mubr.f32.mxu0 0.0
    %96 = vmatmul.mubr.f32.gmra.mrb[0].mxu0 %v26
    %v97 = vpop.f32.mrb[0].mxu0
    %v98 = vadd.f32 0.0, %v97
    %v99 = vpop.f32.mrb[0].mxu0
    %100 = vmatprep.mubr.f32.mxu0 0.0
    %101 = vmatmul.mubr.f32.gmra.mrb[0].mxu0 %v29
    %v102 = vpop.f32.mrb[0].mxu0
    %v103 = vadd.f32 0.0, %v102
    %v104 = vpop.f32.mrb[0].mxu0
    %105 = vdwg.mxu0
    %v106 = vld [vmem:[%s2] sm:$0xff]
    %v107 = vld [vmem:[%s2 + $0x8] sm:$0xff]
    %v108 = vld [vmem:[%s2 + $0x10] sm:$0xff]
    %v109 = vld [vmem:[%s2 + $0x18] sm:$0xff]
    %v110 = vld [vmem:[%s2 + $0x20] sm:$0xff]
    %v111 = vld [vmem:[%s2 + $0x28] sm:$0xff]
    %v112 = vld [vmem:[%s2 + $0x30] sm:$0xff]
    %v113 = vld [vmem:[%s2 + $0x38] sm:$0xff]
    %v114 = vld [vmem:[%s2 + $0x40] sm:$0xff]
    %v115 = vld [vmem:[%s2 + $0x48] sm:$0xff]
    %v116 = vld [vmem:[%s2 + $0x50] sm:$0xff]
    %v117 = vld [vmem:[%s2 + $0x58] sm:$0xff]
    %v118 = vld [vmem:[%s2 + $0x60] sm:$0xff]
    %v119 = vld [vmem:[%s2 + $0x68] sm:$0xff]
    %v120 = vld [vmem:[%s2 + $0x70] sm:$0xff]
    %v121 = vld [vmem:[%s2 + $0x78] sm:$0xff]
    %v122 = vld [vmem:[%s3] sm:$0x1]
    %v124 = vlaneseq
    %v125 = vshrl.u32 %v124, 7
    %v126 = vsub.s32 0, %v125
    %v127 = vrot.slane %v122, %v126
    %129 = vmatprep.subr.mxu0 0.0
    %130 = vmatpush1.msra.mxu0 %v106
    %131 = vmatprep.subr.mxu0 0.0
    %132 = vmatpush1.msra.mxu0 %v107
    %133 = vmatprep.subr.mxu0 0.0
    %134 = vmatpush1.msra.mxu0 %v108
    %135 = vmatprep.subr.mxu0 0.0
    %136 = vmatpush1.msra.mxu0 %v109
    %137 = vmatprep.subr.mxu0 0.0
    %138 = vmatpush1.msra.mxu0 %v110
    %139 = vmatprep.subr.mxu0 0.0
    %140 = vmatpush1.msra.mxu0 %v111
    %141 = vmatprep.subr.mxu0 0.0
    %142 = vmatpush1.msra.mxu0 %v112
    %143 = vmatprep.subr.mxu0 0.0
    %144 = vmatpush1.msra.mxu0 %v113
    %145 = vmatprep.subr.mxu0 0.0
    %146 = vmatpush1.msra.mxu0 %v114
    %147 = vmatprep.subr.mxu0 0.0
    %148 = vmatpush1.msra.mxu0 %v115
    %149 = vmatprep.subr.mxu0 0.0
    %150 = vmatpush1.msra.mxu0 %v116
    %151 = vmatprep.subr.mxu0 0.0
    %152 = vmatpush1.msra.mxu0 %v117
    %153 = vmatprep.subr.mxu0 0.0
    %154 = vmatpush1.msra.mxu0 %v118
    %155 = vmatprep.subr.mxu0 0.0
    %156 = vmatpush1.msra.mxu0 %v119
    %157 = vmatprep.subr.mxu0 0.0
    %158 = vmatpush1.msra.mxu0 %v120
    %159 = vmatprep.subr.mxu0 0.0
    %160 = vmatpush1.msra.mxu0 %v121
    %161 = vmatprep.subr.mxu0 0.0
    %162 = vmatpush1.msra.mxu0 0.0
    %163 = vmatprep.subr.mxu0 0.0
    %164 = vmatpush1.msra.mxu0 0.0
    %165 = vmatprep.subr.mxu0 0.0
    %166 = vmatpush1.msra.mxu0 0.0
    %167 = vmatprep.subr.mxu0 0.0
    %168 = vmatpush1.msra.mxu0 0.0
    %169 = vmatprep.subr.mxu0 0.0
    %170 = vmatpush1.msra.mxu0 0.0
    %171 = vmatprep.subr.mxu0 0.0
    %172 = vmatpush1.msra.mxu0 0.0
    %173 = vmatprep.subr.mxu0 0.0
    %174 = vmatpush1.msra.mxu0 0.0
    %175 = vmatprep.subr.mxu0 0.0
    %176 = vmatpush1.msra.mxu0 0.0
    %177 = vmatprep.subr.mxu0 0.0
    %178 = vmatpush1.msra.mxu0 0.0
    %179 = vmatprep.subr.mxu0 0.0
    %180 = vmatpush1.msra.mxu0 0.0
    %181 = vmatprep.subr.mxu0 0.0
    %182 = vmatpush1.msra.mxu0 0.0
    %183 = vmatprep.subr.mxu0 0.0
    %184 = vmatpush1.msra.mxu0 0.0
    %185 = vmatprep.subr.mxu0 0.0
    %186 = vmatpush1.msra.mxu0 0.0
    %187 = vmatprep.subr.mxu0 0.0
    %188 = vmatpush1.msra.mxu0 0.0
    %189 = vmatprep.subr.mxu0 0.0
    %190 = vmatpush1.msra.mxu0 0.0
    %191 = vmatprep.subr.mxu0 0.0
    %192 = vmatpush1.msra.mxu0 0.0
    %193 = vmatprep.mubr.f32.mxu0 0.0
    %194 = vmatmul.mubr.f32.gmra.mrb[0].mxu0 %v98
    %v195 = vpop.f32.mrb[0].mxu0
    %v196 = vadd.f32 %v127, %v195
    %v197 = vpop.f32.mrb[0].mxu0
    %198 = vmatprep.mubr.f32.mxu0 0.0
    %199 = vmatmul.mubr.f32.gmra.mrb[0].mxu0 %v103
    %v200 = vpop.f32.mrb[0].mxu0
    %v201 = vadd.f32 %v127, %v200
    %v202 = vpop.f32.mrb[0].mxu0
    %203 = vdwg.mxu0
    %204 = vst.msk [vmem:[#allocation3] sm:$0xff] %vm24, %v196
    %205 = vst.msk [vmem:[#allocation3 + $0x8] sm:$0xff] %vm24, %v201
    // Predicated region
    $region18: #{_svd_linear_impl.1} parent=1 // pred_check
      _
    $region19: #{_svd_linear_impl.1} parent=1 // pred_check_branch
      %207 = sbr.rel (0) target = $region21
    $region20: #{_svd_linear_impl.1} parent=1 // pred_region
      %s209 = ssub.s32 256, 256
      %210 = vsyncadd [#allocation4], %s209
      %s211 = sshll.u32 [#allocation3], 4
      %s212 = int_to_ptr.vmem [resolvable:$true] %s211
      %217 = dma.vmem_to_hbm [thread:$0]  %s212, 256, %s4, [#allocation4], 128, 128, 8
    $region21: #{_svd_linear_impl.1} parent=1 // pred_fallthru
      _
    // Predicated region
    $region22: #{_svd_linear_impl.1} parent=1 // pred_check
      _
    $region23: #{_svd_linear_impl.1} parent=1 // pred_check_branch
      %219 = sbr.rel (0) target = $region25
    $region24: #{_svd_linear_impl.1} parent=1 // pred_region
      %220 = dma.done [#allocation4], 256
    $region25: #{_svd_linear_impl.1} parent=1 // pred_fallthru
      _
    %221 = vsyncpa [#allocation4], 1

// kernel: _svd_linear_impl.1
$region0: #{_svd_linear_impl.1}
  #allocation0 [shape = 'u32[]', space=smem, size = 0x4, offset = 0x4, fixed_abs, tag = 'smem constant byte address 0x4 - core index']
  #allocation1 [shape = 'u32[144,128]{1,0:T(1,128)}', space=vmem, size = 0x12000, scoped, tag = 'internal scratch']
  #allocation2 [shape = 'f32[16,128]{1,0:T(8,128)}', space=vmem, size = 0x2000, scoped, tag = 'scratch operand']
  %s0 = inlined_call_operand.vmem [shape: f32[16,32], index: 0, kind: input, shape index: {}]
  %s1 = inlined_call_operand.vmem [shape: f32[32,128], index: 1, kind: input, shape index: {}]
  %s2 = inlined_call_operand.vmem [shape: f32[128,32], index: 2, kind: input, shape index: {}]
  %s3 = inlined_call_operand.vmem [shape: f32[1,32], index: 3, kind: input, shape index: {}]
  %s4 = inlined_call_operand.hbm [shape: f32[16,32], index: 4, kind: output, shape index: {}]
  %s5 = sld [smem:[#allocation0]]
  $region26: #{_svd_linear_impl.1} parent=0
    _
  %s7 = ssub.s32 1, %s5
  %s8 = scalar_select 0, %s7, %s5
  $region1: #{_svd_linear_impl.1} parent=0
    #allocation3 [shape = 'u8[8192]{0}', space=vmem, size = 0x2000, scoped, tag = 'output window, operand 0, single buffered']
    #allocation4 [shape = 's32[1]{0}', space=sflag, size = 0x4, scoped, tag = 'scoped memory for _svd_linear_impl.1']
    %9 = vsyncpa [#allocation4], 0
    // Predicated region
    $region2: #{_svd_linear_impl.1} parent=1 // pred_check
      _
    $region3: #{_svd_linear_impl.1} parent=1 // pred_check_branch
      %11 = sbr.rel (0) target = $region5
    $region4: #{_svd_linear_impl.1} parent=1 // pred_region
      _
    $region5: #{_svd_linear_impl.1} parent=1 // pred_fallthru
      _
    // Predicated region
    $region6: #{_svd_linear_impl.1} parent=1 // pred_check
      _
    $region7: #{_svd_linear_impl.1} parent=1 // pred_check_branch
      %13 = sbr.rel (0) target = $region9
    $region8: #{_svd_linear_impl.1} parent=1 // pred_region
      _
    $region9: #{_svd_linear_impl.1} parent=1 // pred_fallthru
      _
    // Predicated region
    $region10: #{_svd_linear_impl.1} parent=1 // pred_check
      _
    $region11: #{_svd_linear_impl.1} parent=1 // pred_check_branch
      %15 = sbr.rel (0) target = $region13
    $region12: #{_svd_linear_impl.1} parent=1 // pred_region
      _
    $region13: #{_svd_linear_impl.1} parent=1 // pred_fallthru
      _
    // Predicated region
    $region14: #{_svd_linear_impl.1} parent=1 // pred_check
      _
    $region15: #{_svd_linear_impl.1} parent=1 // pred_check_branch
      %17 = sbr.rel (0) target = $region17
    $region16: #{_svd_linear_impl.1} parent=1 // pred_region
      _
    $region17: #{_svd_linear_impl.1} parent=1 // pred_fallthru
      _
    %v18 = vld [vmem:[%s0] sm:$0xff]
    %v19 = vld [vmem:[%s0 + $0x8] sm:$0xff]
    %v20 = vld [vmem:[%s1] sm:$0xff]
    %v21 = vld [vmem:[%s1 + $0x8] sm:$0xff]
    %v22 = vld [vmem:[%s1 + $0x10] sm:$0xff]
    %v23 = vld [vmem:[%s1 + $0x18] sm:$0xff]
    %vm24 = vcmask 261120
    %v26 = vsel %vm24, %v18, 0
    %v29 = vsel %vm24, %v19, 0
    %31 = vmatprep.subr.mxu0 0.0
    %32 = vmatpush1.msra.mxu0 %v20
    %33 = vmatprep.subr.mxu0 0.0
    %34 = vmatpush1.msra.mxu0 %v21
    %35 = vmatprep.subr.mxu0 0.0
    %36 = vmatpush1.msra.mxu0 %v22
    %37 = vmatprep.subr.mxu0 0.0
    %38 = vmatpush1.msra.mxu0 %v23
    %39 = vmatprep.subr.mxu0 0.0
    %40 = vmatpush1.msra.mxu0 0.0
    %41 = vmatprep.subr.mxu0 0.0
    %42 = vmatpush1.msra.mxu0 0.0
    %43 = vmatprep.subr.mxu0 0.0
    %44 = vmatpush1.msra.mxu0 0.0
    %45 = vmatprep.subr.mxu0 0.0
    %46 = vmatpush1.msra.mxu0 0.0
    %47 = vmatprep.subr.mxu0 0.0
    %48 = vmatpush1.msra.mxu0 0.0
    %49 = vmatprep.subr.mxu0 0.0
    %50 = vmatpush1.msra.mxu0 0.0
    %51 = vmatprep.subr.mxu0 0.0
    %52 = vmatpush1.msra.mxu0 0.0
    %53 = vmatprep.subr.mxu0 0.0
    %54 = vmatpush1.msra.mxu0 0.0
    %55 = vmatprep.subr.mxu0 0.0
    %56 = vmatpush1.msra.mxu0 0.0
    %57 = vmatprep.subr.mxu0 0.0
    %58 = vmatpush1.msra.mxu0 0.0
    %59 = vmatprep.subr.mxu0 0.0
    %60 = vmatpush1.msra.mxu0 0.0
    %61 = vmatprep.subr.mxu0 0.0
    %62 = vmatpush1.msra.mxu0 0.0
    %63 = vmatprep.subr.mxu0 0.0
    %64 = vmatpush1.msra.mxu0 0.0
    %65 = vmatprep.subr.mxu0 0.0
    %66 = vmatpush1.msra.mxu0 0.0
    %67 = vmatprep.subr.mxu0 0.0
    %68 = vmatpush1.msra.mxu0 0.0
    %69 = vmatprep.subr.mxu0 0.0
    %70 = vmatpush1.msra.mxu0 0.0
    %71 = vmatprep.subr.mxu0 0.0
    %72 = vmatpush1.msra.mxu0 0.0
    %73 = vmatprep.subr.mxu0 0.0
    %74 = vmatpush1.msra.mxu0 0.0
    %75 = vmatprep.subr.mxu0 0.0
    %76 = vmatpush1.msra.mxu0 0.0
    %77 = vmatprep.subr.mxu0 0.0
    %78 = vmatpush1.msra.mxu0 0.0
    %79 = vmatprep.subr.mxu0 0.0
    %80 = vmatpush1.msra.mxu0 0.0
    %81 = vmatprep.subr.mxu0 0.0
    %82 = vmatpush1.msra.mxu0 0.0
    %83 = vmatprep.subr.mxu0 0.0
    %84 = vmatpush1.msra.mxu0 0.0
    %85 = vmatprep.subr.mxu0 0.0
    %86 = vmatpush1.msra.mxu0 0.0
    %87 = vmatprep.subr.mxu0 0.0
    %88 = vmatpush1.msra.mxu0 0.0
    %89 = vmatprep.subr.mxu0 0.0
    %90 = vmatpush1.msra.mxu0 0.0
    %91 = vmatprep.subr.mxu0 0.0
    %92 = vmatpush1.msra.mxu0 0.0
    %93 = vmatprep.subr.mxu0 0.0
    %94 = vmatpush1.msra.mxu0 0.0
    %95 = vmatprep.mubr.f32.mxu0 0.0
    %96 = vmatmul.mubr.f32.gmra.mrb[0].mxu0 %v26
    %v97 = vpop.f32.mrb[0].mxu0
    %v98 = vadd.f32 0.0, %v97
    %v99 = vpop.f32.mrb[0].mxu0
    %100 = vmatprep.mubr.f32.mxu0 0.0
    %101 = vmatmul.mubr.f32.gmra.mrb[0].mxu0 %v29
    %v102 = vpop.f32.mrb[0].mxu0
    %v103 = vadd.f32 0.0, %v102
    %v104 = vpop.f32.mrb[0].mxu0
    %105 = vdwg.mxu0
    %v106 = vld [vmem:[%s2] sm:$0xff]
    %v107 = vld [vmem:[%s2 + $0x8] sm:$0xff]
    %v108 = vld [vmem:[%s2 + $0x10] sm:$0xff]
    %v109 = vld [vmem:[%s2 + $0x18] sm:$0xff]
    %v110 = vld [vmem:[%s2 + $0x20] sm:$0xff]
    %v111 = vld [vmem:[%s2 + $0x28] sm:$0xff]
    %v112 = vld [vmem:[%s2 + $0x30] sm:$0xff]
    %v113 = vld [vmem:[%s2 + $0x38] sm:$0xff]
    %v114 = vld [vmem:[%s2 + $0x40] sm:$0xff]
    %v115 = vld [vmem:[%s2 + $0x48] sm:$0xff]
    %v116 = vld [vmem:[%s2 + $0x50] sm:$0xff]
    %v117 = vld [vmem:[%s2 + $0x58] sm:$0xff]
    %v118 = vld [vmem:[%s2 + $0x60] sm:$0xff]
    %v119 = vld [vmem:[%s2 + $0x68] sm:$0xff]
    %v120 = vld [vmem:[%s2 + $0x70] sm:$0xff]
    %v121 = vld [vmem:[%s2 + $0x78] sm:$0xff]
    %v122 = vld [vmem:[%s3] sm:$0x1]
    %v124 = vlaneseq
    %v125 = vshrl.u32 %v124, 7
    %v126 = vsub.s32 0, %v125
    %v127 = vrot.slane %v122, %v126
    %129 = vmatprep.subr.mxu0 0.0
    %130 = vmatpush1.msra.mxu0 %v106
    %131 = vmatprep.subr.mxu0 0.0
    %132 = vmatpush1.msra.mxu0 %v107
    %133 = vmatprep.subr.mxu0 0.0
    %134 = vmatpush1.msra.mxu0 %v108
    %135 = vmatprep.subr.mxu0 0.0
    %136 = vmatpush1.msra.mxu0 %v109
    %137 = vmatprep.subr.mxu0 0.0
    %138 = vmatpush1.msra.mxu0 %v110
    %139 = vmatprep.subr.mxu0 0.0
    %140 = vmatpush1.msra.mxu0 %v111
    %141 = vmatprep.subr.mxu0 0.0
    %142 = vmatpush1.msra.mxu0 %v112
    %143 = vmatprep.subr.mxu0 0.0
    %144 = vmatpush1.msra.mxu0 %v113
    %145 = vmatprep.subr.mxu0 0.0
    %146 = vmatpush1.msra.mxu0 %v114
    %147 = vmatprep.subr.mxu0 0.0
    %148 = vmatpush1.msra.mxu0 %v115
    %149 = vmatprep.subr.mxu0 0.0
    %150 = vmatpush1.msra.mxu0 %v116
    %151 = vmatprep.subr.mxu0 0.0
    %152 = vmatpush1.msra.mxu0 %v117
    %153 = vmatprep.subr.mxu0 0.0
    %154 = vmatpush1.msra.mxu0 %v118
    %155 = vmatprep.subr.mxu0 0.0
    %156 = vmatpush1.msra.mxu0 %v119
    %157 = vmatprep.subr.mxu0 0.0
    %158 = vmatpush1.msra.mxu0 %v120
    %159 = vmatprep.subr.mxu0 0.0
    %160 = vmatpush1.msra.mxu0 %v121
    %161 = vmatprep.subr.mxu0 0.0
    %162 = vmatpush1.msra.mxu0 0.0
    %163 = vmatprep.subr.mxu0 0.0
    %164 = vmatpush1.msra.mxu0 0.0
    %165 = vmatprep.subr.mxu0 0.0
    %166 = vmatpush1.msra.mxu0 0.0
    %167 = vmatprep.subr.mxu0 0.0
    %168 = vmatpush1.msra.mxu0 0.0
    %169 = vmatprep.subr.mxu0 0.0
    %170 = vmatpush1.msra.mxu0 0.0
    %171 = vmatprep.subr.mxu0 0.0
    %172 = vmatpush1.msra.mxu0 0.0
    %173 = vmatprep.subr.mxu0 0.0
    %174 = vmatpush1.msra.mxu0 0.0
    %175 = vmatprep.subr.mxu0 0.0
    %176 = vmatpush1.msra.mxu0 0.0
    %177 = vmatprep.subr.mxu0 0.0
    %178 = vmatpush1.msra.mxu0 0.0
    %179 = vmatprep.subr.mxu0 0.0
    %180 = vmatpush1.msra.mxu0 0.0
    %181 = vmatprep.subr.mxu0 0.0
    %182 = vmatpush1.msra.mxu0 0.0
    %183 = vmatprep.subr.mxu0 0.0
    %184 = vmatpush1.msra.mxu0 0.0
    %185 = vmatprep.subr.mxu0 0.0
    %186 = vmatpush1.msra.mxu0 0.0
    %187 = vmatprep.subr.mxu0 0.0
    %188 = vmatpush1.msra.mxu0 0.0
    %189 = vmatprep.subr.mxu0 0.0
    %190 = vmatpush1.msra.mxu0 0.0
    %191 = vmatprep.subr.mxu0 0.0
    %192 = vmatpush1.msra.mxu0 0.0
    %193 = vmatprep.mubr.f32.mxu0 0.0
    %194 = vmatmul.mubr.f32.gmra.mrb[0].mxu0 %v98
    %v195 = vpop.f32.mrb[0].mxu0
    %v196 = vadd.f32 %v127, %v195
    %v197 = vpop.f32.mrb[0].mxu0
    %198 = vmatprep.mubr.f32.mxu0 0.0
    %199 = vmatmul.mubr.f32.gmra.mrb[0].mxu0 %v103
    %v200 = vpop.f32.mrb[0].mxu0
    %v201 = vadd.f32 %v127, %v200
    %v202 = vpop.f32.mrb[0].mxu0
    %203 = vdwg.mxu0
    %204 = vst.msk [vmem:[#allocation3] sm:$0xff] %vm24, %v196
    %205 = vst.msk [vmem:[#allocation3 + $0x8] sm:$0xff] %vm24, %v201
    // Predicated region
    $region18: #{_svd_linear_impl.1} parent=1 // pred_check
      _
    $region19: #{_svd_linear_impl.1} parent=1 // pred_check_branch
      %207 = sbr.rel (0) target = $region21
    $region20: #{_svd_linear_impl.1} parent=1 // pred_region
      %s209 = ssub.s32 256, 256
      %210 = vsyncadd [#allocation4], %s209
      %s211 = sshll.u32 [#allocation3], 4
      %s212 = int_to_ptr.vmem [resolvable:$true] %s211
      %217 = dma.vmem_to_hbm [thread:$0]  %s212, 256, %s4, [#allocation4], 128, 128, 8
    $region21: #{_svd_linear_impl.1} parent=1 // pred_fallthru
      _
    // Predicated region
    $region22: #{_svd_linear_impl.1} parent=1 // pred_check
      _
    $region23: #{_svd_linear_impl.1} parent=1 // pred_check_branch
      %219 = sbr.rel (0) target = $region25
    $region24: #{_svd_linear_impl.1} parent=1 // pred_region
      %220 = dma.done [#allocation4], 256
    $region25: #{_svd_linear_impl.1} parent=1 // pred_fallthru
      _
    %221 = vsyncpa [#allocation4], 1

</llo_original>
